<compile_context>
chip_gen: v6e
topology: v6e:2x2x1
jax: 0.10.0
libtpu: 0.0.40
codegen_flags: <defaults>
</compile_context>

<pallas_src>
import functools

import jax
import jax.numpy as jnp
from jax.experimental import pallas as pl
from jax.experimental.pallas import tpu as pltpu

LANES = 128        # every layer's feature dim zero-padded to one vreg lane width
TILE_B = 8         # f32 sublane tile: batch processed in 8-row tiles
NUM_LAYERS = 4


def _hashed_net_kernel(x_ref, w_ref, b_ref, run_ref,
                       y_ref, run_out_ref,
                       sums_ref, *, batch):
    """One batch tile of the fused 4-layer forward + running-activation update.

    x_ref   : (TILE_B, 128) f32   lane/row zero-padded input tile
    w_ref   : (4, 128, 128) f32   pre-transposed (in, out), zero-padded weights
    b_ref   : (4, 128)      f32   zero-padded biases
    run_ref : (4, 128)      int32 running activation counters (aliased to out 1)
    y_ref   : (TILE_B, 128) f32   padded network-output tile
    run_out_ref : (4, 128)  int32 updated counters (written on last tile only)
    sums_ref    : (4, 128)  f32   VMEM scratch: per-layer full-batch sums
    """
    t = pl.program_id(0)
    nt = pl.num_programs(0)

    @pl.when(t == 0)
    def _():
        sums_ref[...] = jnp.zeros_like(sums_ref)

    x = x_ref[...]

    # Rows past the true batch are zero-padded on input, but the bias add makes
    # them nonzero downstream; mask them out of the batch sums.
    row = jax.lax.broadcasted_iota(jnp.int32, (TILE_B, LANES), 0) + t * TILE_B
    valid = row < batch

    # fc1..fc4 — weights already (in, out): MXU consumes them directly, no
    # in-kernel transposes, all stores lane-dense.
    h1 = jnp.dot(x, w_ref[0], preferred_element_type=jnp.float32) + b_ref[0:1, :]
    h1 = jnp.maximum(h1, 0.0)
    h2 = jnp.dot(h1, w_ref[1], preferred_element_type=jnp.float32) + b_ref[1:2, :]
    h2 = jnp.maximum(h2, 0.0)
    h3 = jnp.dot(h2, w_ref[2], preferred_element_type=jnp.float32) + b_ref[2:3, :]
    y = jnp.dot(h3, w_ref[3], preferred_element_type=jnp.float32) + b_ref[3:4, :]

    y_ref[...] = y

    # Accumulate full-batch per-layer sums across batch tiles (direct row
    # writes; no concatenate / relayout).
    sums_ref[0:1, :] += jnp.sum(jnp.where(valid, h1, 0.0), axis=0, keepdims=True)
    sums_ref[1:2, :] += jnp.sum(jnp.where(valid, h2, 0.0), axis=0, keepdims=True)
    sums_ref[2:3, :] += jnp.sum(jnp.where(valid, h3, 0.0), axis=0, keepdims=True)
    sums_ref[3:4, :] += jnp.sum(jnp.where(valid, y, 0.0), axis=0, keepdims=True)

    # Finalize: running += (sum over whole batch != 0).  Padded lanes have
    # provably-zero activations (zero weights/biases), so they stay 0.
    @pl.when(t == nt - 1)
    def _():
        run_out_ref[...] = run_ref[...] + (sums_ref[...] != 0.0).astype(jnp.int32)


def hashed_network_forward(x, w_packed, b_packed, running_packed):
    """x: (B, input_dim) f32.
    w_packed: (4, 128, 128) f32 pre-transposed zero-padded weights.
    b_packed: (4, 128) f32 zero-padded biases.
    running_packed: (4, 128) int32 packed running_activations state.
    Returns (y_padded (B, 128), new running_packed (4, 128) int32)."""
    B, in_dim = x.shape
    n_tiles = -(-B // TILE_B)
    b_pad = n_tiles * TILE_B
    x_padded = jnp.zeros((b_pad, LANES), jnp.float32).at[:B, :in_dim].set(x)

    kernel = functools.partial(_hashed_net_kernel, batch=B)

    grid_spec = pltpu.PrefetchScalarGridSpec(
        num_scalar_prefetch=0,
        grid=(n_tiles,),
        in_specs=[
            pl.BlockSpec((TILE_B, LANES), lambda t: (t, 0)),                 # x tile
            pl.BlockSpec((NUM_LAYERS, LANES, LANES), lambda t: (0, 0, 0)),   # weights (resident)
            pl.BlockSpec((NUM_LAYERS, LANES), lambda t: (0, 0)),             # biases (resident)
            pl.BlockSpec((NUM_LAYERS, LANES), lambda t: (0, 0)),             # running in (resident)
        ],
        out_specs=(
            pl.BlockSpec((TILE_B, LANES), lambda t: (t, 0)),                 # y tile
            pl.BlockSpec((NUM_LAYERS, LANES), lambda t: (0, 0)),             # running out (accumulator)
        ),
        scratch_shapes=[pltpu.VMEM((NUM_LAYERS, LANES), jnp.float32)],
    )

    fn = pl.pallas_call(
        kernel,
        out_shape=(jax.ShapeDtypeStruct((b_pad, LANES), jnp.float32),
                   jax.ShapeDtypeStruct((NUM_LAYERS, LANES), jnp.int32)),
        grid_spec=grid_spec,
        # running_packed (input 3) aliases the updated-running output (output 1).
        input_output_aliases={3: 1},
        compiler_params=pltpu.CompilerParams(
            # The batch-tile axis carries the running-activation reduction, so
            # it must be "arbitrary" (not megacore-parallel).
            dimension_semantics=("arbitrary",)),
    )
    y_padded, running_new = fn(x_padded, w_packed, b_packed, running_packed)
    return y_padded[:B], running_new


def init_linear_params(key, in_dim, out_dim):
    # Deterministic init matching PyTorch nn.Linear defaults:
    # weight, bias ~ U(-1/sqrt(fan_in), 1/sqrt(fan_in)).
    kw, kb = jax.random.split(key)
    bound = 1.0 / jnp.sqrt(jnp.float32(in_dim))
    w = jax.random.uniform(kw, (out_dim, in_dim), jnp.float32, -bound, bound)
    b = jax.random.uniform(kb, (out_dim,), jnp.float32, -bound, bound)
    return w, b


def pack_params(layers):
    """One-time layout plumbing (NOT per-call): transpose each PyTorch-style
    (out, in) weight to (in, out) and zero-pad K and N to 128, packing all four
    layers into one (4, 128, 128) tensor + one (4, 128) bias tensor so the
    kernel consumes two consolidated DMAs instead of eight.  Padded rows/cols
    are zero, so padded lanes stay exactly zero through the forward."""
    w_packed = jnp.zeros((NUM_LAYERS, LANES, LANES), jnp.float32)
    b_packed = jnp.zeros((NUM_LAYERS, LANES), jnp.float32)
    for l, (w, b) in enumerate(layers):
        out_dim, in_dim = w.shape
        w_packed = w_packed.at[l, :in_dim, :out_dim].set(w.T)
        b_packed = b_packed.at[l, :out_dim].set(b)
    return w_packed, b_packed


if __name__ == "__main__":
    input_dim, hidden_dim, output_dim = 16, 32, 8
    batch = 2

    root = jax.random.PRNGKey(0)
    k_x, k1, k2, k3, k4 = jax.random.split(root, 5)

    x = jax.random.normal(k_x, (batch, input_dim), jnp.float32)

    w1, b1 = init_linear_params(k1, input_dim, hidden_dim)
    w2, b2 = init_linear_params(k2, hidden_dim, hidden_dim)
    w3, b3 = init_linear_params(k3, hidden_dim, hidden_dim)
    w4, b4 = init_linear_params(k4, hidden_dim, output_dim)

    w_packed, b_packed = pack_params([(w1, b1), (w2, b2), (w3, b3), (w4, b4)])

    # Packed running_activations state (module side-effect), row r = layer r+1.
    running_packed = jnp.zeros((NUM_LAYERS, LANES), jnp.int32)

    y_padded, running_packed = hashed_network_forward(x, w_packed, b_packed,
                                                      running_packed)
    jax.block_until_ready((y_padded, running_packed))

    y = y_padded[:, :output_dim]
    running = [running_packed[0, :hidden_dim],
               running_packed[1, :hidden_dim],
               running_packed[2, :hidden_dim],
               running_packed[3, :output_dim]]

    # Pure-JAX reference check (forward + accumulate_metrics).
    h1 = jnp.maximum(x @ w1.T + b1, 0.0)
    h2 = jnp.maximum(h1 @ w2.T + b2, 0.0)
    h3 = h2 @ w3.T + b3
    y_ref = h3 @ w4.T + b4
    run_ref = [(jnp.sum(h1, 0) != 0).astype(jnp.int32),
               (jnp.sum(h2, 0) != 0).astype(jnp.int32),
               (jnp.sum(h3, 0) != 0).astype(jnp.int32),
               (jnp.sum(y_ref, 0) != 0).astype(jnp.int32)]

    assert jnp.allclose(y, y_ref, atol=1e-5, rtol=1e-5)
    for r, rr in zip(running, run_ref):
        assert jnp.array_equal(r, rr)

    # TODO(synk): LSH-based rehash/prune path (update_weights / SimHash / LSH)
    # is host-side control logic with data-dependent bucket sizes and is
    # disabled (self.rehash=False) in the reference forward; not a kernel concern.

    print("KERNEL_OK")
</pallas_src>

<mosaic_0001>
module attributes {stable_mosaic.version = 11 : i64} {
  func.func @_hashed_net_kernel(%arg0: i32, %arg1: memref<8x128xf32, #tpu.memory_space<vmem>>, %arg2: memref<4x128x128xf32, #tpu.memory_space<vmem>>, %arg3: memref<4x128xf32, #tpu.memory_space<vmem>>, %arg4: memref<4x128xi32, #tpu.memory_space<vmem>>, %arg5: memref<8x128xf32, #tpu.memory_space<vmem>>, %arg6: memref<4x128xi32, #tpu.memory_space<vmem>>, %arg7: memref<4x128xf32, #tpu.memory_space<vmem>>) attributes {dimension_semantics = [#tpu.dimension_semantics<arbitrary>], iteration_bounds = array<i64: 1>, scalar_prefetch = 0 : i64, scratch_operands = 1 : i64, tpu.core_type = #tpu.core_type<tc>, window_params = [{transform_indices = @transform_0, window_bounds = array<i64: 8, 128>}, {pipeline_mode = #tpu.pipeline_mode<synchronous>, transform_indices = @transform_1, window_bounds = array<i64: 4, 128, 128>}, {pipeline_mode = #tpu.pipeline_mode<synchronous>, transform_indices = @transform_2, window_bounds = array<i64: 4, 128>}, {pipeline_mode = #tpu.pipeline_mode<synchronous>, transform_indices = @transform_3, window_bounds = array<i64: 4, 128>}, {transform_indices = @transform_4, window_bounds = array<i64: 8, 128>}, {pipeline_mode = #tpu.pipeline_mode<synchronous>, transform_indices = @transform_5, window_bounds = array<i64: 4, 128>}]} {
    %c0_i32 = arith.constant 0 : i32
    %0 = arith.cmpi eq, %arg0, %c0_i32 : i32
    %1 = arith.extui %0 : i1 to i32
    %c0_i32_0 = arith.constant 0 : i32
    %2 = arith.cmpi ne, %1, %c0_i32_0 : i32
    scf.if %2 {
      %cst_52 = arith.constant 0.000000e+00 : f32
      %70 = vector.broadcast %cst_52 : f32 to vector<4x128xf32>
      %c0_53 = arith.constant 0 : index
      %c0_54 = arith.constant 0 : index
      %71 = vector.load %arg7[%c0_53, %c0_54] : memref<4x128xf32, #tpu.memory_space<vmem>>, vector<4x128xf32>
      tpu.vector_store %arg7[%c0_53, %c0_54], %70 {strides = array<i32>} : memref<4x128xf32, #tpu.memory_space<vmem>>, vector<4x128xf32>,
    } else {
    }
    %c0 = arith.constant 0 : index
    %c0_1 = arith.constant 0 : index
    %3 = vector.load %arg1[%c0, %c0_1] : memref<8x128xf32, #tpu.memory_space<vmem>>, vector<8x128xf32>
    %4 = tpu.iota {dimensions = array<i32: 0>} : vector<8x128xi32>
    %c8_i32 = arith.constant 8 : i32
    %5 = arith.muli %arg0, %c8_i32 : i32
    %6 = vector.broadcast %5 : i32 to vector<8x128xi32>
    %7 = arith.addi %4, %6 : vector<8x128xi32>
    %c2_i32 = arith.constant 2 : i32
    %8 = vector.broadcast %c2_i32 : i32 to vector<8x128xi32>
    %9 = arith.cmpi slt, %7, %8 : vector<8x128xi32>
    %c0_2 = arith.constant 0 : index
    %c0_3 = arith.constant 0 : index
    %c0_4 = arith.constant 0 : index
    %10 = vector.load %arg2[%c0_2, %c0_3, %c0_4] : memref<4x128x128xf32, #tpu.memory_space<vmem>>, vector<1x128x128xf32>
    %11 = vector.shape_cast %10 : vector<1x128x128xf32> to vector<128x128xf32>
    %cst = arith.constant dense<0.000000e+00> : vector<8x128xf32>
    %12 = tpu.matmul %3, %11, %cst {dimension_numbers = #tpu.dot_dimension_numbers<[1], [0], [0], [1], [0, 0, 1, 1], [], []>} : vector<8x128xf32>, vector<128x128xf32>, vector<8x128xf32> -> vector<8x128xf32>
    %c0_5 = arith.constant 0 : index
    %c0_6 = arith.constant 0 : index
    %13 = vector.load %arg3[%c0_5, %c0_6] : memref<4x128xf32, #tpu.memory_space<vmem>>, vector<1x128xf32>
    %14 = vector.broadcast %13 : vector<1x128xf32> to vector<8x128xf32>
    %15 = arith.addf %12, %14 : vector<8x128xf32>
    %cst_7 = arith.constant 0.000000e+00 : f32
    %16 = vector.broadcast %cst_7 : f32 to vector<8x128xf32>
    %17 = arith.maximumf %15, %16 : vector<8x128xf32>
    %c1 = arith.constant 1 : index
    %c0_8 = arith.constant 0 : index
    %c0_9 = arith.constant 0 : index
    %18 = vector.load %arg2[%c1, %c0_8, %c0_9] : memref<4x128x128xf32, #tpu.memory_space<vmem>>, vector<1x128x128xf32>
    %19 = vector.shape_cast %18 : vector<1x128x128xf32> to vector<128x128xf32>
    %cst_10 = arith.constant dense<0.000000e+00> : vector<8x128xf32>
    %20 = tpu.matmul %17, %19, %cst_10 {dimension_numbers = #tpu.dot_dimension_numbers<[1], [0], [0], [1], [0, 0, 1, 1], [], []>} : vector<8x128xf32>, vector<128x128xf32>, vector<8x128xf32> -> vector<8x128xf32>
    %c1_11 = arith.constant 1 : index
    %c0_12 = arith.constant 0 : index
    %21 = vector.load %arg3[%c1_11, %c0_12] : memref<4x128xf32, #tpu.memory_space<vmem>>, vector<1x128xf32>
    %22 = vector.broadcast %21 : vector<1x128xf32> to vector<8x128xf32>
    %23 = arith.addf %20, %22 : vector<8x128xf32>
    %cst_13 = arith.constant 0.000000e+00 : f32
    %24 = vector.broadcast %cst_13 : f32 to vector<8x128xf32>
    %25 = arith.maximumf %23, %24 : vector<8x128xf32>
    %c2 = arith.constant 2 : index
    %c0_14 = arith.constant 0 : index
    %c0_15 = arith.constant 0 : index
    %26 = vector.load %arg2[%c2, %c0_14, %c0_15] : memref<4x128x128xf32, #tpu.memory_space<vmem>>, vector<1x128x128xf32>
    %27 = vector.shape_cast %26 : vector<1x128x128xf32> to vector<128x128xf32>
    %cst_16 = arith.constant dense<0.000000e+00> : vector<8x128xf32>
    %28 = tpu.matmul %25, %27, %cst_16 {dimension_numbers = #tpu.dot_dimension_numbers<[1], [0], [0], [1], [0, 0, 1, 1], [], []>} : vector<8x128xf32>, vector<128x128xf32>, vector<8x128xf32> -> vector<8x128xf32>
    %c2_17 = arith.constant 2 : index
    %c0_18 = arith.constant 0 : index
    %29 = vector.load %arg3[%c2_17, %c0_18] : memref<4x128xf32, #tpu.memory_space<vmem>>, vector<1x128xf32>
    %30 = vector.broadcast %29 : vector<1x128xf32> to vector<8x128xf32>
    %31 = arith.addf %28, %30 : vector<8x128xf32>
    %c3 = arith.constant 3 : index
    %c0_19 = arith.constant 0 : index
    %c0_20 = arith.constant 0 : index
    %32 = vector.load %arg2[%c3, %c0_19, %c0_20] : memref<4x128x128xf32, #tpu.memory_space<vmem>>, vector<1x128x128xf32>
    %33 = vector.shape_cast %32 : vector<1x128x128xf32> to vector<128x128xf32>
    %cst_21 = arith.constant dense<0.000000e+00> : vector<8x128xf32>
    %34 = tpu.matmul %31, %33, %cst_21 {dimension_numbers = #tpu.dot_dimension_numbers<[1], [0], [0], [1], [0, 0, 1, 1], [], []>} : vector<8x128xf32>, vector<128x128xf32>, vector<8x128xf32> -> vector<8x128xf32>
    %c3_22 = arith.constant 3 : index
    %c0_23 = arith.constant 0 : index
    %35 = vector.load %arg3[%c3_22, %c0_23] : memref<4x128xf32, #tpu.memory_space<vmem>>, vector<1x128xf32>
    %36 = vector.broadcast %35 : vector<1x128xf32> to vector<8x128xf32>
    %37 = arith.addf %34, %36 : vector<8x128xf32>
    %c0_24 = arith.constant 0 : index
    %c0_25 = arith.constant 0 : index
    %38 = vector.load %arg5[%c0_24, %c0_25] : memref<8x128xf32, #tpu.memory_space<vmem>>, vector<8x128xf32>
    tpu.vector_store %arg5[%c0_24, %c0_25], %37 {strides = array<i32>} : memref<8x128xf32, #tpu.memory_space<vmem>>, vector<8x128xf32>,
    %c0_26 = arith.constant 0 : index
    %c0_27 = arith.constant 0 : index
    %39 = vector.load %arg7[%c0_26, %c0_27] : memref<4x128xf32, #tpu.memory_space<vmem>>, vector<1x128xf32>
    %cst_28 = arith.constant 0.000000e+00 : f32
    %40 = vector.broadcast %cst_28 : f32 to vector<8x128xf32>
    %41 = arith.select %9, %17, %40 : vector<8x128xi1>, vector<8x128xf32>
    %cst_29 = arith.constant dense<0.000000e+00> : vector<128xf32>
    %42 = vector.multi_reduction <add>, %41, %cst_29 [0] : vector<8x128xf32> to vector<128xf32>
    %43 = vector.shape_cast %42 : vector<128xf32> to vector<1x128xf32>
    %44 = arith.addf %39, %43 : vector<1x128xf32>
    %c0_30 = arith.constant 0 : index
    %c0_31 = arith.constant 0 : index
    %45 = vector.load %arg7[%c0_30, %c0_31] : memref<4x128xf32, #tpu.memory_space<vmem>>, vector<1x128xf32>
    tpu.vector_store %arg7[%c0_30, %c0_31], %44 {strides = array<i32>} : memref<4x128xf32, #tpu.memory_space<vmem>>, vector<1x128xf32>,
    %c1_32 = arith.constant 1 : index
    %c0_33 = arith.constant 0 : index
    %46 = vector.load %arg7[%c1_32, %c0_33] : memref<4x128xf32, #tpu.memory_space<vmem>>, vector<1x128xf32>
    %cst_34 = arith.constant 0.000000e+00 : f32
    %47 = vector.broadcast %cst_34 : f32 to vector<8x128xf32>
    %48 = arith.select %9, %25, %47 : vector<8x128xi1>, vector<8x128xf32>
    %cst_35 = arith.constant dense<0.000000e+00> : vector<128xf32>
    %49 = vector.multi_reduction <add>, %48, %cst_35 [0] : vector<8x128xf32> to vector<128xf32>
    %50 = vector.shape_cast %49 : vector<128xf32> to vector<1x128xf32>
    %51 = arith.addf %46, %50 : vector<1x128xf32>
    %c1_36 = arith.constant 1 : index
    %c0_37 = arith.constant 0 : index
    %52 = vector.load %arg7[%c1_36, %c0_37] : memref<4x128xf32, #tpu.memory_space<vmem>>, vector<1x128xf32>
    tpu.vector_store %arg7[%c1_36, %c0_37], %51 {strides = array<i32>} : memref<4x128xf32, #tpu.memory_space<vmem>>, vector<1x128xf32>,
    %c2_38 = arith.constant 2 : index
    %c0_39 = arith.constant 0 : index
    %53 = vector.load %arg7[%c2_38, %c0_39] : memref<4x128xf32, #tpu.memory_space<vmem>>, vector<1x128xf32>
    %cst_40 = arith.constant 0.000000e+00 : f32
    %54 = vector.broadcast %cst_40 : f32 to vector<8x128xf32>
    %55 = arith.select %9, %31, %54 : vector<8x128xi1>, vector<8x128xf32>
    %cst_41 = arith.constant dense<0.000000e+00> : vector<128xf32>
    %56 = vector.multi_reduction <add>, %55, %cst_41 [0] : vector<8x128xf32> to vector<128xf32>
    %57 = vector.shape_cast %56 : vector<128xf32> to vector<1x128xf32>
    %58 = arith.addf %53, %57 : vector<1x128xf32>
    %c2_42 = arith.constant 2 : index
    %c0_43 = arith.constant 0 : index
    %59 = vector.load %arg7[%c2_42, %c0_43] : memref<4x128xf32, #tpu.memory_space<vmem>>, vector<1x128xf32>
    tpu.vector_store %arg7[%c2_42, %c0_43], %58 {strides = array<i32>} : memref<4x128xf32, #tpu.memory_space<vmem>>, vector<1x128xf32>,
    %c3_44 = arith.constant 3 : index
    %c0_45 = arith.constant 0 : index
    %60 = vector.load %arg7[%c3_44, %c0_45] : memref<4x128xf32, #tpu.memory_space<vmem>>, vector<1x128xf32>
    %cst_46 = arith.constant 0.000000e+00 : f32
    %61 = vector.broadcast %cst_46 : f32 to vector<8x128xf32>
    %62 = arith.select %9, %37, %61 : vector<8x128xi1>, vector<8x128xf32>
    %cst_47 = arith.constant dense<0.000000e+00> : vector<128xf32>
    %63 = vector.multi_reduction <add>, %62, %cst_47 [0] : vector<8x128xf32> to vector<128xf32>
    %64 = vector.shape_cast %63 : vector<128xf32> to vector<1x128xf32>
    %65 = arith.addf %60, %64 : vector<1x128xf32>
    %c3_48 = arith.constant 3 : index
    %c0_49 = arith.constant 0 : index
    %66 = vector.load %arg7[%c3_48, %c0_49] : memref<4x128xf32, #tpu.memory_space<vmem>>, vector<1x128xf32>
    tpu.vector_store %arg7[%c3_48, %c0_49], %65 {strides = array<i32>} : memref<4x128xf32, #tpu.memory_space<vmem>>, vector<1x128xf32>,
    %c0_i32_50 = arith.constant 0 : i32
    %67 = arith.cmpi eq, %arg0, %c0_i32_50 : i32
    %68 = arith.extui %67 : i1 to i32
    %c0_i32_51 = arith.constant 0 : i32
    %69 = arith.cmpi ne, %68, %c0_i32_51 : i32
    scf.if %69 {
      %c0_52 = arith.constant 0 : index
      %c0_53 = arith.constant 0 : index
      %70 = vector.load %arg4[%c0_52, %c0_53] : memref<4x128xi32, #tpu.memory_space<vmem>>, vector<4x128xi32>
      %c0_54 = arith.constant 0 : index
      %c0_55 = arith.constant 0 : index
      %71 = vector.load %arg7[%c0_54, %c0_55] : memref<4x128xf32, #tpu.memory_space<vmem>>, vector<4x128xf32>
      %cst_56 = arith.constant 0.000000e+00 : f32
      %72 = vector.broadcast %cst_56 : f32 to vector<4x128xf32>
      %73 = arith.cmpf one, %71, %72 : vector<4x128xf32>
      %74 = arith.extui %73 : vector<4x128xi1> to vector<4x128xi32>
      %75 = arith.addi %70, %74 : vector<4x128xi32>
      %c0_57 = arith.constant 0 : index
      %c0_58 = arith.constant 0 : index
      %76 = vector.load %arg6[%c0_57, %c0_58] : memref<4x128xi32, #tpu.memory_space<vmem>>, vector<4x128xi32>
      tpu.vector_store %arg6[%c0_57, %c0_58], %75 {strides = array<i32>} : memref<4x128xi32, #tpu.memory_space<vmem>>, vector<4x128xi32>,
    } else {
    }
    return
  }
  func.func @transform_0(%arg0: i32) -> (i32, i32) {
    %c0_i32 = arith.constant 0 : i32
    %c0_i32_0 = arith.constant 0 : i32
    return %arg0, %c0_i32 : i32, i32
  }
  func.func @transform_1(%arg0: i32) -> (i32, i32, i32) {
    %c0_i32 = arith.constant 0 : i32
    %c0_i32_0 = arith.constant 0 : i32
    %c0_i32_1 = arith.constant 0 : i32
    %c0_i32_2 = arith.constant 0 : i32
    return %c0_i32, %c0_i32_0, %c0_i32_1 : i32, i32, i32
  }
  func.func @transform_2(%arg0: i32) -> (i32, i32) {
    %c0_i32 = arith.constant 0 : i32
    %c0_i32_0 = arith.constant 0 : i32
    %c0_i32_1 = arith.constant 0 : i32
    return %c0_i32, %c0_i32_0 : i32, i32
  }
  func.func @transform_3(%arg0: i32) -> (i32, i32) {
    %c0_i32 = arith.constant 0 : i32
    %c0_i32_0 = arith.constant 0 : i32
    %c0_i32_1 = arith.constant 0 : i32
    return %c0_i32, %c0_i32_0 : i32, i32
  }
  func.func @transform_4(%arg0: i32) -> (i32, i32) {
    %c0_i32 = arith.constant 0 : i32
    %c0_i32_0 = arith.constant 0 : i32
    return %arg0, %c0_i32 : i32, i32
  }
  func.func @transform_5(%arg0: i32) -> (i32, i32) {
    %c0_i32 = arith.constant 0 : i32
    %c0_i32_0 = arith.constant 0 : i32
    %c0_i32_1 = arith.constant 0 : i32
    return %c0_i32, %c0_i32_0 : i32, i32
  }
}

</mosaic_0001>

<llo_original>
// kernel: tpu_custom_call.1
$region0: #{tpu_custom_call.1}
  #allocation0 [shape = 'u32[]', space=smem, size = 0x4, offset = 0x4, fixed_abs, tag = 'smem constant byte address 0x4 - core index']
  #allocation1 [shape = 'u32[144,128]{1,0:T(1,128)}', space=vmem, size = 0x12000, scoped, tag = 'internal scratch']
  #allocation2 [shape = 'f32[4,128]{1,0:T(4,128)}', space=vmem, size = 0x800, scoped, tag = 'scratch operand']
  %s0 = inlined_call_operand.vmem [shape: f32[8,128], index: 0, kind: input, shape index: {}]
  %s1 = inlined_call_operand.hbm [shape: f32[4,128,128], index: 1, kind: input, shape index: {}]
  %s2 = inlined_call_operand.vmem [shape: f32[4,128], index: 2, kind: input, shape index: {}]
  %s3 = inlined_call_operand.hbm [shape: s32[4,128], index: 3, kind: input, shape index: {}, may-alias: {3,5}]
  %s4 = inlined_call_operand.hbm [shape: f32[8,128], index: 4, kind: output, shape index: {0}]
  %s5 = inlined_call_operand.hbm [shape: s32[4,128], index: 5, kind: output, shape index: {1}, may-alias: {3,5}]
  %6 = xla_tuple %s4, %s5
  %s7 = sld [smem:[#allocation0]]
  $region50: #{tpu_custom_call.1} parent=0
    _
  %s9 = ssub.s32 1, %s7
  %s10 = scalar_select 0, %s9, %s7
  $region1: #{tpu_custom_call.1} parent=0
    #allocation3 [shape = 'u8[262144]{0}', space=vmem, size = 0x40000, scoped, tag = 'input window, operand 1, single buffered']
    #allocation4 [shape = 's32[1]{0}', space=sflag, size = 0x4, scoped, tag = 'scoped memory for tpu_custom_call.1']
    #allocation5 [shape = 's32[1]{0}', space=sflag, size = 0x4, scoped, tag = 'scoped memory for tpu_custom_call.1']
    #allocation6 [shape = 'u8[2048]{0}', space=vmem, size = 0x800, scoped, tag = 'input window, operand 3, single buffered']
    #allocation7 [shape = 's32[1]{0}', space=sflag, size = 0x4, scoped, tag = 'scoped memory for tpu_custom_call.1']
    #allocation8 [shape = 'u8[4096]{0}', space=vmem, size = 0x1000, scoped, tag = 'output window, operand 0, single buffered']
    #allocation9 [shape = 'u8[2048]{0}', space=vmem, size = 0x800, scoped, tag = 'output window, operand 1, single buffered']
    #allocation10 [shape = 's32[1]{0}', space=sflag, size = 0x4, scoped, tag = 'scoped memory for tpu_custom_call.1']
    %11 = vsyncpa [#allocation4], 0
    %12 = vsyncpa [#allocation7], 0
    %13 = vsyncpa [#allocation5], 0
    %14 = vsyncpa [#allocation10], 0
    // Predicated region
    $region2: #{tpu_custom_call.1} parent=1 // pred_check
      _
    $region3: #{tpu_custom_call.1} parent=1 // pred_check_branch
      %16 = sbr.rel (0) target = $region5
    $region4: #{tpu_custom_call.1} parent=1 // pred_region
      _
    $region5: #{tpu_custom_call.1} parent=1 // pred_fallthru
      _
    // Predicated region
    $region6: #{tpu_custom_call.1} parent=1 // pred_check
      _
    $region7: #{tpu_custom_call.1} parent=1 // pred_check_branch
      %18 = sbr.rel (0) target = $region9
    $region8: #{tpu_custom_call.1} parent=1 // pred_region
      %s20 = ssub.s32 8192, 8192
      %21 = vsyncadd [#allocation4], %s20
      %s22 = sshll.u32 [#allocation3], 4
      %s23 = int_to_ptr.vmem [resolvable:$true] %s22
      %28 = dma.hbm_to_vmem [thread:$0]  %s1, 8192, %s23, [#allocation4], 128, 128, 8
    $region9: #{tpu_custom_call.1} parent=1 // pred_fallthru
      _
    // Predicated region
    $region10: #{tpu_custom_call.1} parent=1 // pred_check
      _
    $region11: #{tpu_custom_call.1} parent=1 // pred_check_branch
      %30 = sbr.rel (0) target = $region13
    $region12: #{tpu_custom_call.1} parent=1 // pred_region
      _
    $region13: #{tpu_custom_call.1} parent=1 // pred_fallthru
      _
    // Predicated region
    $region14: #{tpu_custom_call.1} parent=1 // pred_check
      _
    $region15: #{tpu_custom_call.1} parent=1 // pred_check_branch
      %32 = sbr.rel (0) target = $region17
    $region16: #{tpu_custom_call.1} parent=1 // pred_region
      %s34 = ssub.s32 64, 64
      %35 = vsyncadd [#allocation7], %s34
      %s37 = sshll.u32 [#allocation6], 4
      %s38 = int_to_ptr.vmem [resolvable:$true] %s37
      %40 = dma.hbm_to_vmem [thread:$0]  %s3, 64, %s38, [#allocation7]
    $region17: #{tpu_custom_call.1} parent=1 // pred_fallthru
      _
    // Predicated region
    $region18: #{tpu_custom_call.1} parent=1 // pred_check
      _
    $region19: #{tpu_custom_call.1} parent=1 // pred_check_branch
      %42 = sbr.rel (0) target = $region21
    $region20: #{tpu_custom_call.1} parent=1 // pred_region
      %43 = dma.done [#allocation4], 8192
    $region21: #{tpu_custom_call.1} parent=1 // pred_fallthru
      _
    // Predicated region
    $region22: #{tpu_custom_call.1} parent=1 // pred_check
      _
    $region23: #{tpu_custom_call.1} parent=1 // pred_check_branch
      %45 = sbr.rel (0) target = $region25
    $region24: #{tpu_custom_call.1} parent=1 // pred_region
      %46 = dma.done [#allocation7], 64
    $region25: #{tpu_custom_call.1} parent=1 // pred_fallthru
      _
    %p47 = scmp.eq.s32.totalorder 0, 0
    // Predicated region
    $region26: #{tpu_custom_call.1} parent=1 // pred_check
      %p48 = pneg %p47
    $region27: #{tpu_custom_call.1} parent=1 // pred_check_branch
      %50 = sbr.rel (%p48) target = $region29
    $region28: #{tpu_custom_call.1} parent=1 // pred_region
      %51 = vst [vmem:[#allocation2] sm:$0xf] 0.0
    $region29: #{tpu_custom_call.1} parent=1 // pred_fallthru
      _
    %v52 = vld [vmem:[%s0] sm:$0xff]
    %v53 = vlaneseq
    %v54 = vshrl.u32 %v53, 7
    %s55 = smul.u32 0, 8
    %v56 = vstv %s55
    %v57 = vadd.s32 %v54, %v56
    %vm58 = vcmp.lt.s32.totalorder %v57, 2
    %v59 = vld [vmem:[#allocation3] sm:$0xff]
    %v60 = vld [vmem:[#allocation3 + $0x8] sm:$0xff]
    %v61 = vld [vmem:[#allocation3 + $0x10] sm:$0xff]
    %v62 = vld [vmem:[#allocation3 + $0x18] sm:$0xff]
    %v63 = vld [vmem:[#allocation3 + $0x20] sm:$0xff]
    %v64 = vld [vmem:[#allocation3 + $0x28] sm:$0xff]
    %v65 = vld [vmem:[#allocation3 + $0x30] sm:$0xff]
    %v66 = vld [vmem:[#allocation3 + $0x38] sm:$0xff]
    %v67 = vld [vmem:[#allocation3 + $0x40] sm:$0xff]
    %v68 = vld [vmem:[#allocation3 + $0x48] sm:$0xff]
    %v69 = vld [vmem:[#allocation3 + $0x50] sm:$0xff]
    %v70 = vld [vmem:[#allocation3 + $0x58] sm:$0xff]
    %v71 = vld [vmem:[#allocation3 + $0x60] sm:$0xff]
    %v72 = vld [vmem:[#allocation3 + $0x68] sm:$0xff]
    %v73 = vld [vmem:[#allocation3 + $0x70] sm:$0xff]
    %v74 = vld [vmem:[#allocation3 + $0x78] sm:$0xff]
    %v75 = vld [vmem:[%s2] sm:$0x1]
    %v76 = vlaneseq
    %v77 = vshrl.u32 %v76, 7
    %v78 = vsub.s32 0, %v77
    %v79 = vrot.slane %v75, %v78
    %80 = vmatprep.subr.mxu0 0.0
    %81 = vmatpush1.msra.mxu0 %v74
    %82 = vmatprep.subr.mxu0 0.0
    %83 = vmatpush1.msra.mxu0 %v73
    %84 = vmatprep.subr.mxu0 0.0
    %85 = vmatpush1.msra.mxu0 %v72
    %86 = vmatprep.subr.mxu0 0.0
    %87 = vmatpush1.msra.mxu0 %v71
    %88 = vmatprep.subr.mxu0 0.0
    %89 = vmatpush1.msra.mxu0 %v70
    %90 = vmatprep.subr.mxu0 0.0
    %91 = vmatpush1.msra.mxu0 %v69
    %92 = vmatprep.subr.mxu0 0.0
    %93 = vmatpush1.msra.mxu0 %v68
    %94 = vmatprep.subr.mxu0 0.0
    %95 = vmatpush1.msra.mxu0 %v67
    %96 = vmatprep.subr.mxu0 0.0
    %97 = vmatpush1.msra.mxu0 %v66
    %98 = vmatprep.subr.mxu0 0.0
    %99 = vmatpush1.msra.mxu0 %v65
    %100 = vmatprep.subr.mxu0 0.0
    %101 = vmatpush1.msra.mxu0 %v64
    %102 = vmatprep.subr.mxu0 0.0
    %103 = vmatpush1.msra.mxu0 %v63
    %104 = vmatprep.subr.mxu0 0.0
    %105 = vmatpush1.msra.mxu0 %v62
    %106 = vmatprep.subr.mxu0 0.0
    %107 = vmatpush1.msra.mxu0 %v61
    %108 = vmatprep.subr.mxu0 0.0
    %109 = vmatpush1.msra.mxu0 %v60
    %110 = vmatprep.subr.mxu0 0.0
    %111 = vmatpush1.msra.mxu0 %v59
    %112 = vmatprep.subr.mxu0 0.0
    %113 = vmatpush2.msra.mxu0 0.0
    %114 = vmatprep.subr.mxu0 0.0
    %115 = vmatpush2.msra.mxu0 0.0
    %116 = vmatprep.subr.mxu0 0.0
    %117 = vmatpush2.msra.mxu0 0.0
    %118 = vmatprep.subr.mxu0 0.0
    %119 = vmatpush2.msra.mxu0 0.0
    %120 = vmatprep.subr.mxu0 0.0
    %121 = vmatpush2.msra.mxu0 0.0
    %122 = vmatprep.subr.mxu0 0.0
    %123 = vmatpush2.msra.mxu0 0.0
    %124 = vmatprep.subr.mxu0 0.0
    %125 = vmatpush2.msra.mxu0 0.0
    %126 = vmatprep.subr.mxu0 0.0
    %127 = vmatpush2.msra.mxu0 0.0
    %128 = vmatprep.subr.mxu0 0.0
    %129 = vmatpush2.msra.mxu0 0.0
    %130 = vmatprep.subr.mxu0 0.0
    %131 = vmatpush2.msra.mxu0 0.0
    %132 = vmatprep.subr.mxu0 0.0
    %133 = vmatpush2.msra.mxu0 0.0
    %134 = vmatprep.subr.mxu0 0.0
    %135 = vmatpush2.msra.mxu0 0.0
    %136 = vmatprep.subr.mxu0 0.0
    %137 = vmatpush2.msra.mxu0 0.0
    %138 = vmatprep.subr.mxu0 0.0
    %139 = vmatpush2.msra.mxu0 0.0
    %140 = vmatprep.subr.mxu0 0.0
    %141 = vmatpush2.msra.mxu0 0.0
    %142 = vmatprep.subr.mxu0 0.0
    %143 = vmatpush2.msra.mxu0 0.0
    %144 = vmatprep.mubr.f32.mxu0 0.0
    %145 = vmatmul.mubr.f32.gmra.mxu0 %v52
    %v146 = vpop.f32.mrf.mxu0
    %v147 = vadd.f32 %v79, %v146
    %v148 = vpop.f32.mrf.mxu0
    %149 = vdwg.mxu0
    %v150 = vmax.f32 %v147, 0.0
    %s151 = scalar_lea.vmem [#allocation3], 128
    %v152 = vld [vmem:[%s151] sm:$0xff]
    %v153 = vld [vmem:[%s151 + $0x8] sm:$0xff]
    %v154 = vld [vmem:[%s151 + $0x10] sm:$0xff]
    %v155 = vld [vmem:[%s151 + $0x18] sm:$0xff]
    %v156 = vld [vmem:[%s151 + $0x20] sm:$0xff]
    %v157 = vld [vmem:[%s151 + $0x28] sm:$0xff]
    %v158 = vld [vmem:[%s151 + $0x30] sm:$0xff]
    %v159 = vld [vmem:[%s151 + $0x38] sm:$0xff]
    %v160 = vld [vmem:[%s151 + $0x40] sm:$0xff]
    %v161 = vld [vmem:[%s151 + $0x48] sm:$0xff]
    %v162 = vld [vmem:[%s151 + $0x50] sm:$0xff]
    %v163 = vld [vmem:[%s151 + $0x58] sm:$0xff]
    %v164 = vld [vmem:[%s151 + $0x60] sm:$0xff]
    %v165 = vld [vmem:[%s151 + $0x68] sm:$0xff]
    %v166 = vld [vmem:[%s151 + $0x70] sm:$0xff]
    %v167 = vld [vmem:[%s151 + $0x78] sm:$0xff]
    %v168 = vld [vmem:[%s2 + $0x1] sm:$0x1]
    %v169 = vlaneseq
    %v170 = vshrl.u32 %v169, 7
    %v171 = vsub.s32 0, %v170
    %v172 = vrot.slane %v168, %v171
    %173 = vmatprep.subr.mxu0 0.0
    %174 = vmatpush1.msra.mxu0 %v167
    %175 = vmatprep.subr.mxu0 0.0
    %176 = vmatpush1.msra.mxu0 %v166
    %177 = vmatprep.subr.mxu0 0.0
    %178 = vmatpush1.msra.mxu0 %v165
    %179 = vmatprep.subr.mxu0 0.0
    %180 = vmatpush1.msra.mxu0 %v164
    %181 = vmatprep.subr.mxu0 0.0
    %182 = vmatpush1.msra.mxu0 %v163
    %183 = vmatprep.subr.mxu0 0.0
    %184 = vmatpush1.msra.mxu0 %v162
    %185 = vmatprep.subr.mxu0 0.0
    %186 = vmatpush1.msra.mxu0 %v161
    %187 = vmatprep.subr.mxu0 0.0
    %188 = vmatpush1.msra.mxu0 %v160
    %189 = vmatprep.subr.mxu0 0.0
    %190 = vmatpush1.msra.mxu0 %v159
    %191 = vmatprep.subr.mxu0 0.0
    %192 = vmatpush1.msra.mxu0 %v158
    %193 = vmatprep.subr.mxu0 0.0
    %194 = vmatpush1.msra.mxu0 %v157
    %195 = vmatprep.subr.mxu0 0.0
    %196 = vmatpush1.msra.mxu0 %v156
    %197 = vmatprep.subr.mxu0 0.0
    %198 = vmatpush1.msra.mxu0 %v155
    %199 = vmatprep.subr.mxu0 0.0
    %200 = vmatpush1.msra.mxu0 %v154
    %201 = vmatprep.subr.mxu0 0.0
    %202 = vmatpush1.msra.mxu0 %v153
    %203 = vmatprep.subr.mxu0 0.0
    %204 = vmatpush1.msra.mxu0 %v152
    %205 = vmatprep.subr.mxu0 0.0
    %206 = vmatpush2.msra.mxu0 0.0
    %207 = vmatprep.subr.mxu0 0.0
    %208 = vmatpush2.msra.mxu0 0.0
    %209 = vmatprep.subr.mxu0 0.0
    %210 = vmatpush2.msra.mxu0 0.0
    %211 = vmatprep.subr.mxu0 0.0
    %212 = vmatpush2.msra.mxu0 0.0
    %213 = vmatprep.subr.mxu0 0.0
    %214 = vmatpush2.msra.mxu0 0.0
    %215 = vmatprep.subr.mxu0 0.0
    %216 = vmatpush2.msra.mxu0 0.0
    %217 = vmatprep.subr.mxu0 0.0
    %218 = vmatpush2.msra.mxu0 0.0
    %219 = vmatprep.subr.mxu0 0.0
    %220 = vmatpush2.msra.mxu0 0.0
    %221 = vmatprep.subr.mxu0 0.0
    %222 = vmatpush2.msra.mxu0 0.0
    %223 = vmatprep.subr.mxu0 0.0
    %224 = vmatpush2.msra.mxu0 0.0
    %225 = vmatprep.subr.mxu0 0.0
    %226 = vmatpush2.msra.mxu0 0.0
    %227 = vmatprep.subr.mxu0 0.0
    %228 = vmatpush2.msra.mxu0 0.0
    %229 = vmatprep.subr.mxu0 0.0
    %230 = vmatpush2.msra.mxu0 0.0
    %231 = vmatprep.subr.mxu0 0.0
    %232 = vmatpush2.msra.mxu0 0.0
    %233 = vmatprep.subr.mxu0 0.0
    %234 = vmatpush2.msra.mxu0 0.0
    %235 = vmatprep.subr.mxu0 0.0
    %236 = vmatpush2.msra.mxu0 0.0
    %237 = vmatprep.mubr.f32.mxu0 0.0
    %238 = vmatmul.mubr.f32.gmra.mxu0 %v150
    %v239 = vpop.f32.mrf.mxu0
    %v240 = vadd.f32 %v172, %v239
    %v241 = vpop.f32.mrf.mxu0
    %242 = vdwg.mxu0
    %v243 = vmax.f32 %v240, 0.0
    %s244 = scalar_lea.vmem [#allocation3], 256
    %v245 = vld [vmem:[%s244] sm:$0xff]
    %v246 = vld [vmem:[%s244 + $0x8] sm:$0xff]
    %v247 = vld [vmem:[%s244 + $0x10] sm:$0xff]
    %v248 = vld [vmem:[%s244 + $0x18] sm:$0xff]
    %v249 = vld [vmem:[%s244 + $0x20] sm:$0xff]
    %v250 = vld [vmem:[%s244 + $0x28] sm:$0xff]
    %v251 = vld [vmem:[%s244 + $0x30] sm:$0xff]
    %v252 = vld [vmem:[%s244 + $0x38] sm:$0xff]
    %v253 = vld [vmem:[%s244 + $0x40] sm:$0xff]
    %v254 = vld [vmem:[%s244 + $0x48] sm:$0xff]
    %v255 = vld [vmem:[%s244 + $0x50] sm:$0xff]
    %v256 = vld [vmem:[%s244 + $0x58] sm:$0xff]
    %v257 = vld [vmem:[%s244 + $0x60] sm:$0xff]
    %v258 = vld [vmem:[%s244 + $0x68] sm:$0xff]
    %v259 = vld [vmem:[%s244 + $0x70] sm:$0xff]
    %v260 = vld [vmem:[%s244 + $0x78] sm:$0xff]
    %v261 = vld [vmem:[%s2 + $0x2] sm:$0x1]
    %v262 = vlaneseq
    %v263 = vshrl.u32 %v262, 7
    %v264 = vsub.s32 0, %v263
    %v265 = vrot.slane %v261, %v264
    %266 = vmatprep.subr.mxu0 0.0
    %267 = vmatpush1.msra.mxu0 %v260
    %268 = vmatprep.subr.mxu0 0.0
    %269 = vmatpush1.msra.mxu0 %v259
    %270 = vmatprep.subr.mxu0 0.0
    %271 = vmatpush1.msra.mxu0 %v258
    %272 = vmatprep.subr.mxu0 0.0
    %273 = vmatpush1.msra.mxu0 %v257
    %274 = vmatprep.subr.mxu0 0.0
    %275 = vmatpush1.msra.mxu0 %v256
    %276 = vmatprep.subr.mxu0 0.0
    %277 = vmatpush1.msra.mxu0 %v255
    %278 = vmatprep.subr.mxu0 0.0
    %279 = vmatpush1.msra.mxu0 %v254
    %280 = vmatprep.subr.mxu0 0.0
    %281 = vmatpush1.msra.mxu0 %v253
    %282 = vmatprep.subr.mxu0 0.0
    %283 = vmatpush1.msra.mxu0 %v252
    %284 = vmatprep.subr.mxu0 0.0
    %285 = vmatpush1.msra.mxu0 %v251
    %286 = vmatprep.subr.mxu0 0.0
    %287 = vmatpush1.msra.mxu0 %v250
    %288 = vmatprep.subr.mxu0 0.0
    %289 = vmatpush1.msra.mxu0 %v249
    %290 = vmatprep.subr.mxu0 0.0
    %291 = vmatpush1.msra.mxu0 %v248
    %292 = vmatprep.subr.mxu0 0.0
    %293 = vmatpush1.msra.mxu0 %v247
    %294 = vmatprep.subr.mxu0 0.0
    %295 = vmatpush1.msra.mxu0 %v246
    %296 = vmatprep.subr.mxu0 0.0
    %297 = vmatpush1.msra.mxu0 %v245
    %298 = vmatprep.subr.mxu0 0.0
    %299 = vmatpush2.msra.mxu0 0.0
    %300 = vmatprep.subr.mxu0 0.0
    %301 = vmatpush2.msra.mxu0 0.0
    %302 = vmatprep.subr.mxu0 0.0
    %303 = vmatpush2.msra.mxu0 0.0
    %304 = vmatprep.subr.mxu0 0.0
    %305 = vmatpush2.msra.mxu0 0.0
    %306 = vmatprep.subr.mxu0 0.0
    %307 = vmatpush2.msra.mxu0 0.0
    %308 = vmatprep.subr.mxu0 0.0
    %309 = vmatpush2.msra.mxu0 0.0
    %310 = vmatprep.subr.mxu0 0.0
    %311 = vmatpush2.msra.mxu0 0.0
    %312 = vmatprep.subr.mxu0 0.0
    %313 = vmatpush2.msra.mxu0 0.0
    %314 = vmatprep.subr.mxu0 0.0
    %315 = vmatpush2.msra.mxu0 0.0
    %316 = vmatprep.subr.mxu0 0.0
    %317 = vmatpush2.msra.mxu0 0.0
    %318 = vmatprep.subr.mxu0 0.0
    %319 = vmatpush2.msra.mxu0 0.0
    %320 = vmatprep.subr.mxu0 0.0
    %321 = vmatpush2.msra.mxu0 0.0
    %322 = vmatprep.subr.mxu0 0.0
    %323 = vmatpush2.msra.mxu0 0.0
    %324 = vmatprep.subr.mxu0 0.0
    %325 = vmatpush2.msra.mxu0 0.0
    %326 = vmatprep.subr.mxu0 0.0
    %327 = vmatpush2.msra.mxu0 0.0
    %328 = vmatprep.subr.mxu0 0.0
    %329 = vmatpush2.msra.mxu0 0.0
    %330 = vmatprep.mubr.f32.mxu0 0.0
    %331 = vmatmul.mubr.f32.gmra.mxu0 %v243
    %v332 = vpop.f32.mrf.mxu0
    %v333 = vadd.f32 %v265, %v332
    %v334 = vpop.f32.mrf.mxu0
    %335 = vdwg.mxu0
    %s336 = scalar_lea.vmem [#allocation3], 384
    %v337 = vld [vmem:[%s336] sm:$0xff]
    %v338 = vld [vmem:[%s336 + $0x8] sm:$0xff]
    %v339 = vld [vmem:[%s336 + $0x10] sm:$0xff]
    %v340 = vld [vmem:[%s336 + $0x18] sm:$0xff]
    %v341 = vld [vmem:[%s336 + $0x20] sm:$0xff]
    %v342 = vld [vmem:[%s336 + $0x28] sm:$0xff]
    %v343 = vld [vmem:[%s336 + $0x30] sm:$0xff]
    %v344 = vld [vmem:[%s336 + $0x38] sm:$0xff]
    %v345 = vld [vmem:[%s336 + $0x40] sm:$0xff]
    %v346 = vld [vmem:[%s336 + $0x48] sm:$0xff]
    %v347 = vld [vmem:[%s336 + $0x50] sm:$0xff]
    %v348 = vld [vmem:[%s336 + $0x58] sm:$0xff]
    %v349 = vld [vmem:[%s336 + $0x60] sm:$0xff]
    %v350 = vld [vmem:[%s336 + $0x68] sm:$0xff]
    %v351 = vld [vmem:[%s336 + $0x70] sm:$0xff]
    %v352 = vld [vmem:[%s336 + $0x78] sm:$0xff]
    %v353 = vld [vmem:[%s2 + $0x3] sm:$0x1]
    %v354 = vlaneseq
    %v355 = vshrl.u32 %v354, 7
    %v356 = vsub.s32 0, %v355
    %v357 = vrot.slane %v353, %v356
    %358 = vmatprep.subr.mxu0 0.0
    %359 = vmatpush1.msra.mxu0 %v352
    %360 = vmatprep.subr.mxu0 0.0
    %361 = vmatpush1.msra.mxu0 %v351
    %362 = vmatprep.subr.mxu0 0.0
    %363 = vmatpush1.msra.mxu0 %v350
    %364 = vmatprep.subr.mxu0 0.0
    %365 = vmatpush1.msra.mxu0 %v349
    %366 = vmatprep.subr.mxu0 0.0
    %367 = vmatpush1.msra.mxu0 %v348
    %368 = vmatprep.subr.mxu0 0.0
    %369 = vmatpush1.msra.mxu0 %v347
    %370 = vmatprep.subr.mxu0 0.0
    %371 = vmatpush1.msra.mxu0 %v346
    %372 = vmatprep.subr.mxu0 0.0
    %373 = vmatpush1.msra.mxu0 %v345
    %374 = vmatprep.subr.mxu0 0.0
    %375 = vmatpush1.msra.mxu0 %v344
    %376 = vmatprep.subr.mxu0 0.0
    %377 = vmatpush1.msra.mxu0 %v343
    %378 = vmatprep.subr.mxu0 0.0
    %379 = vmatpush1.msra.mxu0 %v342
    %380 = vmatprep.subr.mxu0 0.0
    %381 = vmatpush1.msra.mxu0 %v341
    %382 = vmatprep.subr.mxu0 0.0
    %383 = vmatpush1.msra.mxu0 %v340
    %384 = vmatprep.subr.mxu0 0.0
    %385 = vmatpush1.msra.mxu0 %v339
    %386 = vmatprep.subr.mxu0 0.0
    %387 = vmatpush1.msra.mxu0 %v338
    %388 = vmatprep.subr.mxu0 0.0
    %389 = vmatpush1.msra.mxu0 %v337
    %390 = vmatprep.subr.mxu0 0.0
    %391 = vmatpush2.msra.mxu0 0.0
    %392 = vmatprep.subr.mxu0 0.0
    %393 = vmatpush2.msra.mxu0 0.0
    %394 = vmatprep.subr.mxu0 0.0
    %395 = vmatpush2.msra.mxu0 0.0
    %396 = vmatprep.subr.mxu0 0.0
    %397 = vmatpush2.msra.mxu0 0.0
    %398 = vmatprep.subr.mxu0 0.0
    %399 = vmatpush2.msra.mxu0 0.0
    %400 = vmatprep.subr.mxu0 0.0
    %401 = vmatpush2.msra.mxu0 0.0
    %402 = vmatprep.subr.mxu0 0.0
    %403 = vmatpush2.msra.mxu0 0.0
    %404 = vmatprep.subr.mxu0 0.0
    %405 = vmatpush2.msra.mxu0 0.0
    %406 = vmatprep.subr.mxu0 0.0
    %407 = vmatpush2.msra.mxu0 0.0
    %408 = vmatprep.subr.mxu0 0.0
    %409 = vmatpush2.msra.mxu0 0.0
    %410 = vmatprep.subr.mxu0 0.0
    %411 = vmatpush2.msra.mxu0 0.0
    %412 = vmatprep.subr.mxu0 0.0
    %413 = vmatpush2.msra.mxu0 0.0
    %414 = vmatprep.subr.mxu0 0.0
    %415 = vmatpush2.msra.mxu0 0.0
    %416 = vmatprep.subr.mxu0 0.0
    %417 = vmatpush2.msra.mxu0 0.0
    %418 = vmatprep.subr.mxu0 0.0
    %419 = vmatpush2.msra.mxu0 0.0
    %420 = vmatprep.subr.mxu0 0.0
    %421 = vmatpush2.msra.mxu0 0.0
    %422 = vmatprep.mubr.f32.mxu0 0.0
    %423 = vmatmul.mubr.f32.gmra.mxu0 %v333
    %v424 = vpop.f32.mrf.mxu0
    %v425 = vadd.f32 %v357, %v424
    %v426 = vpop.f32.mrf.mxu0
    %427 = vdwg.mxu0
    %428 = vst [vmem:[#allocation8] sm:$0xff] %v425
    %v429 = vld [vmem:[#allocation2] sm:$0x1]
    %v430 = vsel %vm58, %v150, 0.0
    %v431 = vrot.slane %v430, 4
    %v432 = vadd.f32 %v430, %v431
    %v433 = vrot.slane %v432, 2
    %v434 = vadd.f32 %v432, %v433
    %v435 = vrot.slane %v434, 1
    %v436 = vadd.f32 %v434, %v435
    %v437 = vadd.f32 %v429, %v436
    %438 = vst [vmem:[#allocation2] sm:$0x1] %v437
    %v439 = vld [vmem:[#allocation2 + $0x1] sm:$0x1]
    %v440 = vsel %vm58, %v243, 0.0
    %v441 = vrot.slane %v440, 4
    %v442 = vadd.f32 %v440, %v441
    %v443 = vrot.slane %v442, 2
    %v444 = vadd.f32 %v442, %v443
    %v445 = vrot.slane %v444, 1
    %v446 = vadd.f32 %v444, %v445
    %v447 = vadd.f32 %v439, %v446
    %448 = vst [vmem:[#allocation2 + $0x1] sm:$0x1] %v447
    %v449 = vld [vmem:[#allocation2 + $0x2] sm:$0x1]
    %v450 = vsel %vm58, %v333, 0.0
    %v451 = vrot.slane %v450, 4
    %v452 = vadd.f32 %v450, %v451
    %v453 = vrot.slane %v452, 2
    %v454 = vadd.f32 %v452, %v453
    %v455 = vrot.slane %v454, 1
    %v456 = vadd.f32 %v454, %v455
    %v457 = vadd.f32 %v449, %v456
    %458 = vst [vmem:[#allocation2 + $0x2] sm:$0x1] %v457
    %v459 = vld [vmem:[#allocation2 + $0x3] sm:$0x1]
    %v460 = vsel %vm58, %v425, 0.0
    %v461 = vrot.slane %v460, 4
    %v462 = vadd.f32 %v460, %v461
    %v463 = vrot.slane %v462, 2
    %v464 = vadd.f32 %v462, %v463
    %v465 = vrot.slane %v464, 1
    %v466 = vadd.f32 %v464, %v465
    %v467 = vadd.f32 %v459, %v466
    %468 = vst [vmem:[#allocation2 + $0x3] sm:$0x1] %v467
    // Predicated region
    $region30: #{tpu_custom_call.1} parent=1 // pred_check
      %p469 = pneg %p47
    $region31: #{tpu_custom_call.1} parent=1 // pred_check_branch
      %471 = sbr.rel (%p469) target = $region33
    $region32: #{tpu_custom_call.1} parent=1 // pred_region
      %v472 = vld [vmem:[#allocation6] sm:$0xf]
      %v473 = vld [vmem:[#allocation2] sm:$0xf]
      %vm474 = vcmp.ne.f32.partialorder %v473, 0.0
      %v475 = vsel %vm474, 1, 0
      %v476 = vadd.s32 %v472, %v475
      %477 = vst [vmem:[#allocation9] sm:$0xf] %v476
    $region33: #{tpu_custom_call.1} parent=1 // pred_fallthru
      _
    // Predicated region
    $region34: #{tpu_custom_call.1} parent=1 // pred_check
      _
    $region35: #{tpu_custom_call.1} parent=1 // pred_check_branch
      %479 = sbr.rel (0) target = $region37
    $region36: #{tpu_custom_call.1} parent=1 // pred_region
      %s481 = ssub.s32 128, 128
      %482 = vsyncadd [#allocation5], %s481
      %s484 = sshll.u32 [#allocation8], 4
      %s485 = int_to_ptr.vmem [resolvable:$true] %s484
      %487 = dma.vmem_to_hbm [thread:$0]  %s485, 128, %s4, [#allocation5]
    $region37: #{tpu_custom_call.1} parent=1 // pred_fallthru
      _
    // Predicated region
    $region38: #{tpu_custom_call.1} parent=1 // pred_check
      _
    $region39: #{tpu_custom_call.1} parent=1 // pred_check_branch
      %489 = sbr.rel (0) target = $region41
    $region40: #{tpu_custom_call.1} parent=1 // pred_region
      %s491 = ssub.s32 64, 64
      %492 = vsyncadd [#allocation10], %s491
      %s494 = sshll.u32 [#allocation9], 4
      %s495 = int_to_ptr.vmem [resolvable:$true] %s494
      %497 = dma.vmem_to_hbm [thread:$0]  %s495, 64, %s5, [#allocation10]
    $region41: #{tpu_custom_call.1} parent=1 // pred_fallthru
      _
    // Predicated region
    $region42: #{tpu_custom_call.1} parent=1 // pred_check
      _
    $region43: #{tpu_custom_call.1} parent=1 // pred_check_branch
      %499 = sbr.rel (0) target = $region45
    $region44: #{tpu_custom_call.1} parent=1 // pred_region
      %500 = dma.done [#allocation5], 128
    $region45: #{tpu_custom_call.1} parent=1 // pred_fallthru
      _
    // Predicated region
    $region46: #{tpu_custom_call.1} parent=1 // pred_check
      _
    $region47: #{tpu_custom_call.1} parent=1 // pred_check_branch
      %502 = sbr.rel (0) target = $region49
    $region48: #{tpu_custom_call.1} parent=1 // pred_region
      %503 = dma.done [#allocation10], 64
    $region49: #{tpu_custom_call.1} parent=1 // pred_fallthru
      _
    %504 = vsyncpa [#allocation4], 1
    %505 = vsyncpa [#allocation7], 1
    %506 = vsyncpa [#allocation5], 1
    %507 = vsyncpa [#allocation10], 1

</llo_original>
